<compile_context>
chip_gen: v7x
topology: tpu7x:2x2x1
jax: 0.10.0
libtpu: 0.0.40
codegen_flags: <defaults>
</compile_context>

<pallas_src>
import functools

import jax
import jax.numpy as jnp
from jax.experimental import pallas as pl
from jax.experimental.pallas import tpu as pltpu


# ---------------------------------------------------------------------------
# Kernel 1: GroupNorm statistics -> fused per-channel scale / shift
#           grid = (B,), one lane-dense block = all groups of one image.
# ---------------------------------------------------------------------------
def _gn_stats_kernel(x_ref, gamma_ref, beta_ref, scale_ref, shift_ref, *, eps):
    # x_ref:     (1, G, Cg, HW)     gamma_ref / beta_ref: (G, Cg, 1) resident
    # scale_ref / shift_ref: (1, G, Cg, 1)
    x = x_ref[0].astype(jnp.float32)                         # (G, Cg, HW)
    n = x.shape[1] * x.shape[2]
    # single pass: E[x], E[x^2] (sequential lane- then sublane-reductions)
    s1 = jnp.sum(jnp.sum(x, axis=2, keepdims=True), axis=1, keepdims=True)
    s2 = jnp.sum(jnp.sum(x * x, axis=2, keepdims=True), axis=1, keepdims=True)
    mean = s1 / n                                            # (G, 1, 1)
    var = s2 / n - mean * mean
    rstd = jax.lax.rsqrt(var + eps)                          # (G, 1, 1)
    scale = gamma_ref[...] * rstd                            # (G, Cg, 1)
    shift = beta_ref[...] - mean * scale                     # (G, Cg, 1)
    scale_ref[0] = scale
    shift_ref[0] = shift


# ---------------------------------------------------------------------------
# Kernel 2: fused normalize + Swish + zero-pad + Conv2d 3x3 (padding=1)
#           grid = (B, Cout_tiles), co innermost ("arbitrary").
# ---------------------------------------------------------------------------
def _fused_norm_conv_kernel(x_ref, scale_ref, shift_ref, w_ref, b_ref, o_ref,
                            xsh_ref, *, H, W, Wp):
    # x_ref:     (1, C, H*W)        raw input, one image (resident along co)
    # scale_ref: (1, C, 1)  f32     fused GN scale (gamma * rstd)
    # shift_ref: (1, C, 1)  f32     fused GN shift (beta - mean*scale)
    # w_ref:     (9, T_co, C) bf16  conv taps
    # b_ref:     (T_co, 1)  f32     bias
    # o_ref:     (1, T_co, H*Wp)
    # xsh_ref:   (3, C, (H+2)*Wp) bf16 scratch: dx-shifted, zero-padded,
    #            normalized+activated image (persists across co steps)
    t_co = o_ref.shape[1]
    l_out = o_ref.shape[2]

    # ---- Stage the normalized / activated / padded image once per image ----
    # co is the inner grid axis and marked "arbitrary", so co == 0 runs first
    # for every batch element and the scratch is valid for all co tiles.
    @pl.when(pl.program_id(1) == 0)
    def _stage():
        xsh_ref[...] = jnp.zeros_like(xsh_ref)
        scale = scale_ref[0]                                 # (C, 1)
        shift = shift_ref[0]                                 # (C, 1)
        # TODO(synk): switch to a fori_loop / halo pipeline for very large H.
        for h in range(H):                                   # static unroll
            xr = x_ref[0, :, pl.ds(h * W, W)].astype(jnp.float32)   # (C, W)
            yr = xr * scale + shift                          # GroupNorm affine
            yr = yr * (1.0 / (1.0 + jnp.exp(-yr)))           # Swish (EUP exp)
            yr = yr.astype(xsh_ref.dtype)
            base = (h + 1) * Wp + 1                          # interior position
            for dx in range(3):                              # 3 shifted copies
                xsh_ref[dx, :, pl.ds(base - dx, W)] = yr

    # ---- 3x3 conv: 9 bf16 MXU matmuls on lane-aligned slices ---------------
    acc = jnp.broadcast_to(b_ref[...], (t_co, l_out))        # bias-initialised f32
    for dy in range(3):
        for dx in range(3):
            patch = xsh_ref[dx, :, pl.ds(dy * Wp, l_out)]    # (C, l_out) bf16, aligned
            acc = acc + jnp.dot(w_ref[3 * dy + dx], patch,
                                preferred_element_type=jnp.float32)
    o_ref[0] = acc.astype(o_ref.dtype)


# ---------------------------------------------------------------------------
# Wrapper: full Block forward pass
# ---------------------------------------------------------------------------
def block_forward(x, gn_gamma, gn_beta, conv_w, conv_b, *, groups=32,
                  eps=1e-5, dropout=0.0):
    """x: (B, C, H, W) NCHW.  gn_gamma/gn_beta: (C,).
    conv_w: (Cout, C, 3, 3) OIHW.  conv_b: (Cout,)."""
    assert dropout == 0.0  # TODO(synk): nn.Dropout(p>0) not implemented
    B, C, H, W = x.shape
    assert C % groups == 0
    Cg = C // groups
    HW = H * W
    Cout = conv_w.shape[0]

    # --- Kernel 1: per-(batch, channel) fused GN coefficients ---------------
    x4 = x.reshape(B, groups, Cg, HW)                        # free metadata reshape
    g3 = gn_gamma.astype(jnp.float32).reshape(groups, Cg, 1)
    b3 = gn_beta.astype(jnp.float32).reshape(groups, Cg, 1)

    scale, shift = pl.pallas_call(
        functools.partial(_gn_stats_kernel, eps=eps),
        out_shape=(jax.ShapeDtypeStruct((B, groups, Cg, 1), jnp.float32),
                   jax.ShapeDtypeStruct((B, groups, Cg, 1), jnp.float32)),
        grid=(B,),
        in_specs=[
            pl.BlockSpec((1, groups, Cg, HW), lambda b: (b, 0, 0, 0)),
            pl.BlockSpec((groups, Cg, 1), lambda b: (0, 0, 0)),   # resident
            pl.BlockSpec((groups, Cg, 1), lambda b: (0, 0, 0)),   # resident
        ],
        out_specs=(
            pl.BlockSpec((1, groups, Cg, 1), lambda b: (b, 0, 0, 0)),
            pl.BlockSpec((1, groups, Cg, 1), lambda b: (b, 0, 0, 0)),
        ),
        compiler_params=pltpu.CompilerParams(
            dimension_semantics=("parallel",)),
    )(x4, g3, b3)

    scale_c = scale.reshape(B, C, 1)
    shift_c = shift.reshape(B, C, 1)

    # --- Kernel 2: fused normalize + Swish + pad + Conv2d 3x3 ---------------
    Wp = ((W + 2 + 127) // 128) * 128        # lane-dense padded row width
    L_in = (H + 2) * Wp                      # staged (shifted) image length
    L_out = H * Wp                           # lane-dense output length per row

    x_flat = x.reshape(B, C, HW)             # free metadata reshape

    # weights as 9 taps of (Cout, Cin) in bf16 (MXU operands); bias as a column
    w_taps = jnp.transpose(conv_w, (2, 3, 0, 1)).reshape(9, Cout, C)
    w_taps = w_taps.astype(jnp.bfloat16)
    b_col = conv_b.astype(jnp.float32).reshape(Cout, 1)

    # Cout tile: full Cout up to 256 (MXU is 256x256 on v6e/v7x).
    if Cout <= 256:
        t_co = Cout
    else:
        t_co = Cout
        for cand in (256, 128, 64, 32):
            if Cout % cand == 0:
                t_co = cand
                break
    n_co = Cout // t_co

    out_flat = pl.pallas_call(
        functools.partial(_fused_norm_conv_kernel, H=H, W=W, Wp=Wp),
        out_shape=jax.ShapeDtypeStruct((B, Cout, L_out), x.dtype),
        grid=(B, n_co),
        in_specs=[
            pl.BlockSpec((1, C, HW), lambda b, co: (b, 0, 0)),     # const along co
            pl.BlockSpec((1, C, 1), lambda b, co: (b, 0, 0)),
            pl.BlockSpec((1, C, 1), lambda b, co: (b, 0, 0)),
            pl.BlockSpec((9, t_co, C), lambda b, co: (0, co, 0)),
            pl.BlockSpec((t_co, 1), lambda b, co: (co, 0)),
        ],
        out_specs=pl.BlockSpec((1, t_co, L_out), lambda b, co: (b, co, 0)),
        scratch_shapes=[pltpu.VMEM((3, C, L_in), jnp.bfloat16)],
        compiler_params=pltpu.CompilerParams(
            # B is "parallel" (megacore shards images); co must stay
            # "arbitrary" so staging at co==0 is always executed in order and
            # the resident x block is not duplicated across cores.
            dimension_semantics=("parallel", "arbitrary"),
            vmem_limit_bytes=64 * 1024 * 1024),
    )(x_flat, scale_c, shift_c, w_taps, b_col)

    # Crop the junk / padding columns of the row-flattened layout.
    assert out_flat.shape == (B, Cout, H * Wp)   # crop below relies on this
    out = out_flat.reshape(B, Cout, H, Wp)[:, :, :, :W]
    return out


# ---------------------------------------------------------------------------
# Reference (plain JAX, f32 end to end) for the correctness check
# ---------------------------------------------------------------------------
def _reference(x, gamma, beta, conv_w, conv_b, groups, eps=1e-5):
    B, C, H, W = x.shape
    xg = x.reshape(B, groups, C // groups, H * W).astype(jnp.float32)
    mean = xg.mean(axis=(2, 3), keepdims=True)
    var = jnp.square(xg - mean).mean(axis=(2, 3), keepdims=True)
    xn = ((xg - mean) / jnp.sqrt(var + eps)).reshape(B, C, H, W)
    y = xn * gamma.reshape(1, C, 1, 1) + beta.reshape(1, C, 1, 1)
    y = y * jax.nn.sigmoid(y)
    out = jax.lax.conv_general_dilated(
        y, conv_w, window_strides=(1, 1), padding=((1, 1), (1, 1)),
        dimension_numbers=("NCHW", "OIHW", "NCHW"))
    return out + conv_b.reshape(1, -1, 1, 1)


# ---------------------------------------------------------------------------
if __name__ == "__main__":
    B, C, H, W = 2, 32, 16, 16      # dim=32, small spatial
    Cout = 16                       # dim_out
    groups = 8                      # dim must be divisible by groups

    key = jax.random.PRNGKey(0)
    k1, k2, k3, k4, k5 = jax.random.split(key, 5)
    x = jax.random.normal(k1, (B, C, H, W), dtype=jnp.float32)
    gn_gamma = 1.0 + 0.1 * jax.random.normal(k2, (C,), dtype=jnp.float32)
    gn_beta = 0.1 * jax.random.normal(k3, (C,), dtype=jnp.float32)
    conv_w = 0.1 * jax.random.normal(k4, (Cout, C, 3, 3), dtype=jnp.float32)
    conv_b = 0.1 * jax.random.normal(k5, (Cout,), dtype=jnp.float32)

    out = block_forward(x, gn_gamma, gn_beta, conv_w, conv_b, groups=groups)
    out = jax.block_until_ready(out)

    ref = _reference(x, gn_gamma, gn_beta, conv_w, conv_b, groups)
    assert out.shape == ref.shape
    max_err = float(jnp.max(jnp.abs(out - ref)))
    # Tolerance accounts for bf16 MXU operands in the conv (f32 accumulation);
    # the f32 reference differs by ~1e-3 typical, <1e-2 worst case.
    assert jnp.allclose(out, ref, atol=3e-2, rtol=3e-2), f"max_err={max_err}"

    print("KERNEL_OK")
</pallas_src>

<mosaic_0001>
module attributes {stable_mosaic.version = 11 : i64} {
  func.func @_gn_stats_kernel(%arg0: i32, %arg1: memref<1x8x4x256xf32, #tpu.memory_space<vmem>>, %arg2: memref<8x4x1xf32, #tpu.memory_space<vmem>>, %arg3: memref<8x4x1xf32, #tpu.memory_space<vmem>>, %arg4: memref<1x8x4x1xf32, #tpu.memory_space<vmem>>, %arg5: memref<1x8x4x1xf32, #tpu.memory_space<vmem>>) attributes {dimension_semantics = [#tpu.dimension_semantics<parallel>], iteration_bounds = array<i64: 2>, scalar_prefetch = 0 : i64, scratch_operands = 0 : i64, tpu.core_type = #tpu.core_type<tc>, window_params = [{transform_indices = @transform_0, window_bounds = array<i64: 1, 8, 4, 256>}, {pipeline_mode = #tpu.pipeline_mode<synchronous>, transform_indices = @transform_1, window_bounds = array<i64: 8, 4, 1>}, {pipeline_mode = #tpu.pipeline_mode<synchronous>, transform_indices = @transform_2, window_bounds = array<i64: 8, 4, 1>}, {transform_indices = @transform_3, window_bounds = array<i64: 1, 8, 4, 1>}, {transform_indices = @transform_4, window_bounds = array<i64: 1, 8, 4, 1>}]} {
    %c0 = arith.constant 0 : index
    %c0_0 = arith.constant 0 : index
    %c0_1 = arith.constant 0 : index
    %c0_2 = arith.constant 0 : index
    %0 = vector.load %arg1[%c0, %c0_0, %c0_1, %c0_2] : memref<1x8x4x256xf32, #tpu.memory_space<vmem>>, vector<1x8x4x256xf32>
    %1 = vector.shape_cast %0 : vector<1x8x4x256xf32> to vector<8x4x256xf32>
    %cst = arith.constant dense<0.000000e+00> : vector<8x4xf32>
    %2 = vector.multi_reduction <add>, %1, %cst [2] : vector<8x4x256xf32> to vector<8x4xf32>
    %3 = vector.shape_cast %2 : vector<8x4xf32> to vector<8x4x1xf32>
    %cst_3 = arith.constant dense<0.000000e+00> : vector<8x1xf32>
    %4 = vector.multi_reduction <add>, %3, %cst_3 [1] : vector<8x4x1xf32> to vector<8x1xf32>
    %5 = vector.shape_cast %4 : vector<8x1xf32> to vector<8x1x1xf32>
    %6 = arith.mulf %1, %1 : vector<8x4x256xf32>
    %cst_4 = arith.constant dense<0.000000e+00> : vector<8x4xf32>
    %7 = vector.multi_reduction <add>, %6, %cst_4 [2] : vector<8x4x256xf32> to vector<8x4xf32>
    %8 = vector.shape_cast %7 : vector<8x4xf32> to vector<8x4x1xf32>
    %cst_5 = arith.constant dense<0.000000e+00> : vector<8x1xf32>
    %9 = vector.multi_reduction <add>, %8, %cst_5 [1] : vector<8x4x1xf32> to vector<8x1xf32>
    %10 = vector.shape_cast %9 : vector<8x1xf32> to vector<8x1x1xf32>
    %cst_6 = arith.constant 1.024000e+03 : f32
    %11 = vector.broadcast %cst_6 : f32 to vector<8x1x1xf32>
    %12 = arith.divf %5, %11 : vector<8x1x1xf32>
    %cst_7 = arith.constant 1.024000e+03 : f32
    %13 = vector.broadcast %cst_7 : f32 to vector<8x1x1xf32>
    %14 = arith.divf %10, %13 : vector<8x1x1xf32>
    %15 = arith.mulf %12, %12 : vector<8x1x1xf32>
    %16 = arith.subf %14, %15 : vector<8x1x1xf32>
    %cst_8 = arith.constant 9.99999974E-6 : f32
    %17 = vector.broadcast %cst_8 : f32 to vector<8x1x1xf32>
    %18 = arith.addf %16, %17 : vector<8x1x1xf32>
    %19 = math.rsqrt %18 : vector<8x1x1xf32>
    %c0_9 = arith.constant 0 : index
    %c0_10 = arith.constant 0 : index
    %c0_11 = arith.constant 0 : index
    %20 = vector.load %arg2[%c0_9, %c0_10, %c0_11] : memref<8x4x1xf32, #tpu.memory_space<vmem>>, vector<8x4x1xf32>
    %21 = vector.broadcast %19 : vector<8x1x1xf32> to vector<8x4x1xf32>
    %22 = arith.mulf %20, %21 : vector<8x4x1xf32>
    %c0_12 = arith.constant 0 : index
    %c0_13 = arith.constant 0 : index
    %c0_14 = arith.constant 0 : index
    %23 = vector.load %arg3[%c0_12, %c0_13, %c0_14] : memref<8x4x1xf32, #tpu.memory_space<vmem>>, vector<8x4x1xf32>
    %24 = vector.broadcast %12 : vector<8x1x1xf32> to vector<8x4x1xf32>
    %25 = arith.mulf %24, %22 : vector<8x4x1xf32>
    %26 = arith.subf %23, %25 : vector<8x4x1xf32>
    %c0_15 = arith.constant 0 : index
    %c0_16 = arith.constant 0 : index
    %c0_17 = arith.constant 0 : index
    %c0_18 = arith.constant 0 : index
    %27 = vector.load %arg4[%c0_15, %c0_16, %c0_17, %c0_18] : memref<1x8x4x1xf32, #tpu.memory_space<vmem>>, vector<1x8x4x1xf32>
    %28 = vector.shape_cast %27 : vector<1x8x4x1xf32> to vector<8x4x1xf32>
    %29 = vector.shape_cast %22 : vector<8x4x1xf32> to vector<1x8x4x1xf32>
    tpu.vector_store %arg4[%c0_15, %c0_16, %c0_17, %c0_18], %29 {strides = array<i32>} : memref<1x8x4x1xf32, #tpu.memory_space<vmem>>, vector<1x8x4x1xf32>,
    %c0_19 = arith.constant 0 : index
    %c0_20 = arith.constant 0 : index
    %c0_21 = arith.constant 0 : index
    %c0_22 = arith.constant 0 : index
    %30 = vector.load %arg5[%c0_19, %c0_20, %c0_21, %c0_22] : memref<1x8x4x1xf32, #tpu.memory_space<vmem>>, vector<1x8x4x1xf32>
    %31 = vector.shape_cast %30 : vector<1x8x4x1xf32> to vector<8x4x1xf32>
    %32 = vector.shape_cast %26 : vector<8x4x1xf32> to vector<1x8x4x1xf32>
    tpu.vector_store %arg5[%c0_19, %c0_20, %c0_21, %c0_22], %32 {strides = array<i32>} : memref<1x8x4x1xf32, #tpu.memory_space<vmem>>, vector<1x8x4x1xf32>,
    return
  }
  func.func @transform_0(%arg0: i32) -> (i32, i32, i32, i32) {
    %c0_i32 = arith.constant 0 : i32
    %c0_i32_0 = arith.constant 0 : i32
    %c0_i32_1 = arith.constant 0 : i32
    %c0_i32_2 = arith.constant 0 : i32
    return %arg0, %c0_i32, %c0_i32_0, %c0_i32_1 : i32, i32, i32, i32
  }
  func.func @transform_1(%arg0: i32) -> (i32, i32, i32) {
    %c0_i32 = arith.constant 0 : i32
    %c0_i32_0 = arith.constant 0 : i32
    %c0_i32_1 = arith.constant 0 : i32
    %c0_i32_2 = arith.constant 0 : i32
    return %c0_i32, %c0_i32_0, %c0_i32_1 : i32, i32, i32
  }
  func.func @transform_2(%arg0: i32) -> (i32, i32, i32) {
    %c0_i32 = arith.constant 0 : i32
    %c0_i32_0 = arith.constant 0 : i32
    %c0_i32_1 = arith.constant 0 : i32
    %c0_i32_2 = arith.constant 0 : i32
    return %c0_i32, %c0_i32_0, %c0_i32_1 : i32, i32, i32
  }
  func.func @transform_3(%arg0: i32) -> (i32, i32, i32, i32) {
    %c0_i32 = arith.constant 0 : i32
    %c0_i32_0 = arith.constant 0 : i32
    %c0_i32_1 = arith.constant 0 : i32
    %c0_i32_2 = arith.constant 0 : i32
    return %arg0, %c0_i32, %c0_i32_0, %c0_i32_1 : i32, i32, i32, i32
  }
  func.func @transform_4(%arg0: i32) -> (i32, i32, i32, i32) {
    %c0_i32 = arith.constant 0 : i32
    %c0_i32_0 = arith.constant 0 : i32
    %c0_i32_1 = arith.constant 0 : i32
    %c0_i32_2 = arith.constant 0 : i32
    return %arg0, %c0_i32, %c0_i32_0, %c0_i32_1 : i32, i32, i32, i32
  }
}

</mosaic_0001>

<llo_original>
// kernel: tpu_custom_call.1
$region0: #{tpu_custom_call.1}
  #allocation0 [shape = 'u32[]', space=smem, size = 0x4, offset = 0x4, fixed_abs, tag = 'smem constant byte address 0x4 - core index']
  #allocation1 [shape = 'u32[144,128]{1,0:T(1,128)}', space=vmem, size = 0x12000, scoped, tag = 'internal scratch']
  %s0 = inlined_call_operand.hbm [shape: f32[2,8,4,256], index: 0, kind: input, shape index: {}]
  %s1 = inlined_call_operand.vmem [shape: f32[8,4,1], index: 1, kind: input, shape index: {}]
  %s2 = inlined_call_operand.vmem [shape: f32[8,4,1], index: 2, kind: input, shape index: {}]
  %s3 = inlined_call_operand.vmem [shape: f32[2,8,4,1], index: 3, kind: output, shape index: {0}]
  %s4 = inlined_call_operand.vmem [shape: f32[2,8,4,1], index: 4, kind: output, shape index: {1}]
  %5 = xla_tuple %s3, %s4
  %s6 = sld [smem:[#allocation0]]
  $region57: #{tpu_custom_call.1} parent=0
    _
  %s8 = ssub.s32 1, %s6
  %s9 = scalar_select 0, %s8, %s6
  $region1: #{tpu_custom_call.1} parent=0
    #allocation2 [shape = 'u8[65536]{0}', space=vmem, size = 0x10000, scoped, tag = 'input window, operand 0']
    #allocation3 [shape = 's32[2]{0}', space=sflag, size = 0x8, scoped, tag = 'scoped memory for tpu_custom_call.1']
    %10 = vsyncpa [#allocation3], 0
    %s11 = scalar_lea.sflag [#allocation3], 1
    %12 = vsyncpa %s11, 0
    loop: start=0, step=1, limit=4
    $region2: #{tpu_custom_call.1} parent=1 // loop_pre_header
      _
    $region3: #{tpu_custom_call.1} parent=1 // loop_header
      %s14 = sphi 0, %s18
      %p15 = scmp.ge.s32.totalorder %s14, 4
      %s24 = sphi 0, %s26
      %s27 = sphi 0, %s24
      %s28 = sphi 0, %s27
      %s44 = sphi 0, %s28
      %s48 = sphi 0, %s48
      %s50 = sphi 0, %s48
      %s51 = sphi 0, %s50
      %s65 = sphi 0, %s51
      %s69 = sphi 0, %s69
      %s71 = sphi 0, %s69
      %s72 = sphi 0, %s71
      %s86 = sphi 0, %s72
      %s92 = sphi 0, %s94
      %s95 = sphi 0, %s92
      %s96 = sphi 0, %s95
      %s112 = sphi 0, %s96
      %s118 = sphi 0, %s120
      %s121 = sphi 0, %s118
      %s122 = sphi 0, %s121
      %s138 = sphi 0, %s122
    $region4: #{tpu_custom_call.1} parent=1 // loop_header_branch
      %17 = sbr.rel (%p15) target = $region8
    $region5: #{tpu_custom_call.1} parent=1 // loop_body
      %s19 = ssub.s32 %s14, 1
      %s20 = ssub.s32 %s14, 2
      %s21 = sadd.s32 %s14, 1
      %s22 = ssub.s32 %s14, %s21
      %p23 = scmp.eq.s32.totalorder %s22, 0
      %s25 = sadd.s32 %s24, 1
      %s26 = scalar_select %p23, %s24, %s25
      %p29 = pneg %p23
      %p30 = scmp.eq.s32.totalorder %s14, 1
      %p31 = por %p29, %p30
      %p32 = scmp.ne.s32.totalorder %s24, %s27
      %p33 = scmp.eq.s32.totalorder %s14, 0
      %p34 = por %p32, %p33
      %p35 = scmp.ne.s32.totalorder %s24, %s27
      %p36 = scmp.eq.s32.totalorder %s19, 1
      %p37 = por %p35, %p36
      %p38 = scmp.ne.s32.totalorder %s27, %s28
      %p39 = scmp.eq.s32.totalorder %s19, 0
      %p40 = por %p38, %p39
      %p41 = scmp.ne.s32.totalorder %s27, %s28
      %p42 = scmp.eq.s32.totalorder %s20, 1
      %p43 = por %p41, %p42
      %p45 = scmp.ne.s32.totalorder %s28, %s44
      %p46 = scmp.eq.s32.totalorder %s20, 0
      %p47 = por %p45, %p46
      %s49 = sadd.s32 %s48, 1
      %p52 = scmp.eq.s32.totalorder %s14, 1
      %p53 = scmp.ne.s32.totalorder %s48, %s50
      %p54 = scmp.eq.s32.totalorder %s14, 0
      %p55 = por %p53, %p54
      %p56 = scmp.ne.s32.totalorder %s48, %s50
      %p57 = scmp.eq.s32.totalorder %s19, 1
      %p58 = por %p56, %p57
      %p59 = scmp.ne.s32.totalorder %s50, %s51
      %p60 = scmp.eq.s32.totalorder %s19, 0
      %p61 = por %p59, %p60
      %p62 = scmp.ne.s32.totalorder %s50, %s51
      %p63 = scmp.eq.s32.totalorder %s20, 1
      %p64 = por %p62, %p63
      %p66 = scmp.ne.s32.totalorder %s51, %s65
      %p67 = scmp.eq.s32.totalorder %s20, 0
      %p68 = por %p66, %p67
      %s70 = sadd.s32 %s69, 1
      %p73 = scmp.eq.s32.totalorder %s14, 1
      %p74 = scmp.ne.s32.totalorder %s69, %s71
      %p75 = scmp.eq.s32.totalorder %s14, 0
      %p76 = por %p74, %p75
      %p77 = scmp.ne.s32.totalorder %s69, %s71
      %p78 = scmp.eq.s32.totalorder %s19, 1
      %p79 = por %p77, %p78
      %p80 = scmp.ne.s32.totalorder %s71, %s72
      %p81 = scmp.eq.s32.totalorder %s19, 0
      %p82 = por %p80, %p81
      %p83 = scmp.ne.s32.totalorder %s71, %s72
      %p84 = scmp.eq.s32.totalorder %s20, 1
      %p85 = por %p83, %p84
      %p87 = scmp.ne.s32.totalorder %s72, %s86
      %p88 = scmp.eq.s32.totalorder %s20, 0
      %p89 = por %p87, %p88
      %s90 = ssub.s32 %s14, %s21
      %p91 = scmp.eq.s32.totalorder %s90, 0
      %s93 = sadd.s32 %s92, 1
      %s94 = scalar_select %p91, %s92, %s93
      %p97 = pneg %p91
      %p98 = scmp.eq.s32.totalorder %s14, 1
      %p99 = por %p97, %p98
      %p100 = scmp.ne.s32.totalorder %s92, %s95
      %p101 = scmp.eq.s32.totalorder %s14, 0
      %p102 = por %p100, %p101
      %p103 = scmp.ne.s32.totalorder %s92, %s95
      %p104 = scmp.eq.s32.totalorder %s19, 1
      %p105 = por %p103, %p104
      %p106 = scmp.ne.s32.totalorder %s95, %s96
      %p107 = scmp.eq.s32.totalorder %s19, 0
      %p108 = por %p106, %p107
      %p109 = scmp.ne.s32.totalorder %s95, %s96
      %p110 = scmp.eq.s32.totalorder %s20, 1
      %p111 = por %p109, %p110
      %p113 = scmp.ne.s32.totalorder %s96, %s112
      %p114 = scmp.eq.s32.totalorder %s20, 0
      %p115 = por %p113, %p114
      %s116 = ssub.s32 %s14, %s21
      %p117 = scmp.eq.s32.totalorder %s116, 0
      %s119 = sadd.s32 %s118, 1
      %s120 = scalar_select %p117, %s118, %s119
      %p123 = pneg %p117
      %p124 = scmp.eq.s32.totalorder %s14, 1
      %p125 = por %p123, %p124
      %p126 = scmp.ne.s32.totalorder %s118, %s121
      %p127 = scmp.eq.s32.totalorder %s14, 0
      %p128 = por %p126, %p127
      %p129 = scmp.ne.s32.totalorder %s118, %s121
      %p130 = scmp.eq.s32.totalorder %s19, 1
      %p131 = por %p129, %p130
      %p132 = scmp.ne.s32.totalorder %s121, %s122
      %p133 = scmp.eq.s32.totalorder %s19, 0
      %p134 = por %p132, %p133
      %p135 = scmp.ne.s32.totalorder %s121, %s122
      %p136 = scmp.eq.s32.totalorder %s20, 1
      %p137 = por %p135, %p136
      %p139 = scmp.ne.s32.totalorder %s122, %s138
      %p140 = scmp.eq.s32.totalorder %s20, 0
      %p141 = por %p139, %p140
      %p142 = scmp.le.s32.totalorder 1, %s14
      %p143 = scmp.lt.s32.totalorder %s14, 3
      %p144 = pnand %p142, %p143
      %p145 = pneg %p144
      // Predicated region
      $region9: #{tpu_custom_call.1} parent=5 // pred_check
        _
      $region10: #{tpu_custom_call.1} parent=5 // pred_check_branch
        %147 = sbr.rel (%p144) target = $region12
      $region11: #{tpu_custom_call.1} parent=5 // pred_region
        %s148 = ssub.s32 %s14, 1
        // Predicated region
        $region13: #{tpu_custom_call.1} parent=11 // pred_check
          %p149 = pneg %p61
        $region14: #{tpu_custom_call.1} parent=11 // pred_check_branch
          %151 = sbr.rel (%p149) target = $region16
        $region15: #{tpu_custom_call.1} parent=11 // pred_region
          _
        $region16: #{tpu_custom_call.1} parent=11 // pred_fallthru
          _
        // Predicated region
        $region17: #{tpu_custom_call.1} parent=11 // pred_check
          %p152 = pneg %p82
        $region18: #{tpu_custom_call.1} parent=11 // pred_check_branch
          %154 = sbr.rel (%p152) target = $region20
        $region19: #{tpu_custom_call.1} parent=11 // pred_region
          _
        $region20: #{tpu_custom_call.1} parent=11 // pred_fallthru
          _
      $region12: #{tpu_custom_call.1} parent=5 // pred_fallthru
        _
      %p155 = scmp.lt.s32.totalorder %s14, 2
      // Predicated region
      $region21: #{tpu_custom_call.1} parent=5 // pred_check
        %p156 = pneg %p155
      $region22: #{tpu_custom_call.1} parent=5 // pred_check_branch
        %158 = sbr.rel (%p156) target = $region24
      $region23: #{tpu_custom_call.1} parent=5 // pred_region
        // Predicated region
        $region25: #{tpu_custom_call.1} parent=23 // pred_check
          %p159 = pneg %p34
        $region26: #{tpu_custom_call.1} parent=23 // pred_check_branch
          %161 = sbr.rel (%p159) target = $region28
        $region27: #{tpu_custom_call.1} parent=23 // pred_region
          %s162 = sand.u32 %s24, 1
          %s163 = scalar_lea.sflag [#allocation3], %s162
          %s164 = sand.u32 %s24, 1
          %s165 = smul.addr %s164, 64
          %s166 = scalar_lea.vmem [#allocation2], %s165
          %s168 = ssub.s32 1024, 1024
          %169 = vsyncadd %s163, %s168
          %s170 = smul.addr %s14, 16
          %s171 = smul.addr %s170, 64
          %s172 = scalar_lea.hbm %s0, %s171
          %s173 = sshll.u32 %s166, 4
          %s174 = int_to_ptr.vmem [resolvable:$true] %s173
          %179 = dma.hbm_to_vmem [thread:$0]  %s172, 1024, %s174, %s163, 128, 128, 8
        $region28: #{tpu_custom_call.1} parent=23 // pred_fallthru
          _
      $region24: #{tpu_custom_call.1} parent=5 // pred_fallthru
        _
      %p180 = scmp.le.s32.totalorder 1, %s14
      %p181 = scmp.lt.s32.totalorder %s14, 3
      %p182 = pnand %p180, %p181
      %p183 = pneg %p182
      // Predicated region
      $region29: #{tpu_custom_call.1} parent=5 // pred_check
        _
      $region30: #{tpu_custom_call.1} parent=5 // pred_check_branch
        %185 = sbr.rel (%p182) target = $region32
      $region31: #{tpu_custom_call.1} parent=5 // pred_region
        %s186 = ssub.s32 %s14, 1
        %s187 = sand.u32 %s27, 1
        %s188 = scalar_lea.sflag [#allocation3], %s187
        %s189 = sand.u32 %s27, 1
        %s190 = smul.addr %s189, 64
        %s191 = scalar_lea.vmem [#allocation2], %s190
        // Predicated region
        $region33: #{tpu_custom_call.1} parent=31 // pred_check
          %p192 = pneg %p40
        $region34: #{tpu_custom_call.1} parent=31 // pred_check_branch
          %194 = sbr.rel (%p192) target = $region36
        $region35: #{tpu_custom_call.1} parent=31 // pred_region
          %195 = dma.done %s188, 1024
        $region36: #{tpu_custom_call.1} parent=31 // pred_fallthru
          _
        %s196 = sand.u32 %s27, 1
        %s197 = scalar_lea.sflag [#allocation3], %s196
        %s198 = sand.u32 %s27, 1
        %s199 = smul.addr %s198, 64
        %s200 = scalar_lea.vmem [#allocation2], %s199
        %p201 = pneg %p40
        %p202 = pneg %p37
        %p203 = pneg %p61
        %p204 = pneg %p58
        %p205 = pneg %p82
        %p206 = pneg %p79
        %p207 = pneg %p108
        %p208 = pneg %p105
        %p209 = scmp.lt.s32.totalorder %s19, 1
        %s210 = scalar_select %p209, %s19, 1
        %s211 = smul.addr %s210, 8
        %s212 = smul.addr %s211, 4
        %s213 = scalar_lea.vmem %s3, %s212
        %p214 = pneg %p134
        %p215 = pneg %p131
        %p216 = scmp.lt.s32.totalorder %s19, 1
        %s217 = scalar_select %p216, %s19, 1
        %s218 = smul.addr %s217, 8
        %s219 = smul.addr %s218, 4
        %s220 = scalar_lea.vmem %s4, %s219
        %p221 = scmp.lt.s32.totalorder %s19, 1
        %s222 = scalar_select %p221, %s19, 1
        %s223 = smul.addr %s222, 8
        %s224 = smul.addr %s223, 4
        %s225 = scalar_lea.vmem %s3, %s224
        %p226 = scmp.lt.s32.totalorder %s19, 1
        %s227 = scalar_select %p226, %s19, 1
        %s228 = smul.addr %s227, 8
        %s229 = smul.addr %s228, 4
        %s230 = scalar_lea.vmem %s4, %s229
        %v231 = vld [vmem:[%s191] sm:$0xff]
        %v232 = vld [vmem:[%s191 + $0x8] sm:$0xff]
        %v233 = vld [vmem:[%s191 + $0x10] sm:$0xff]
        %v234 = vld [vmem:[%s191 + $0x18] sm:$0xff]
        %v235 = vld [vmem:[%s191 + $0x20] sm:$0xff]
        %v236 = vld [vmem:[%s191 + $0x28] sm:$0xff]
        %v237 = vld [vmem:[%s191 + $0x30] sm:$0xff]
        %v238 = vld [vmem:[%s191 + $0x38] sm:$0xff]
        %v247 = vcombine.high %v231, %v231
        %v248 = vcombine.high %v232, %v232
        %v249 = vcombine.high %v233, %v233
        %v250 = vcombine.high %v234, %v234
        %v251 = vcombine.high %v235, %v235
        %v252 = vcombine.high %v236, %v236
        %v253 = vcombine.high %v237, %v237
        %v254 = vcombine.high %v238, %v238
        %vm263 = vcmask 1043456
        %v264 = vsel %vm263, %v231, 0.0
        %v265 = vsel %vm263, %v247, 0.0
        %v266 = vadd.f32 %v264, %v265
        %267 = vadd.xlane.f32.xlu0 %v266
        %v268 = vpop.xlane.xlu0 %267
        %v269 = vsel %vm263, %v232, 0.0
        %v270 = vsel %vm263, %v248, 0.0
        %v271 = vadd.f32 %v269, %v270
        %272 = vadd.xlane.f32.xlu0 %v271
        %v273 = vpop.xlane.xlu0 %272
        %v274 = vsel %vm263, %v233, 0.0
        %v275 = vsel %vm263, %v249, 0.0
        %v276 = vadd.f32 %v274, %v275
        %277 = vadd.xlane.f32.xlu0 %v276
        %v278 = vpop.xlane.xlu0 %277
        %v279 = vsel %vm263, %v234, 0.0
        %v280 = vsel %vm263, %v250, 0.0
        %v281 = vadd.f32 %v279, %v280
        %282 = vadd.xlane.f32.xlu0 %v281
        %v283 = vpop.xlane.xlu0 %282
        %v284 = vsel %vm263, %v235, 0.0
        %v285 = vsel %vm263, %v251, 0.0
        %v286 = vadd.f32 %v284, %v285
        %287 = vadd.xlane.f32.xlu0 %v286
        %v288 = vpop.xlane.xlu0 %287
        %v289 = vsel %vm263, %v236, 0.0
        %v290 = vsel %vm263, %v252, 0.0
        %v291 = vadd.f32 %v289, %v290
        %292 = vadd.xlane.f32.xlu0 %v291
        %v293 = vpop.xlane.xlu0 %292
        %v294 = vsel %vm263, %v237, 0.0
        %v295 = vsel %vm263, %v253, 0.0
        %v296 = vadd.f32 %v294, %v295
        %297 = vadd.xlane.f32.xlu0 %v296
        %v298 = vpop.xlane.xlu0 %297
        %v299 = vsel %vm263, %v238, 0.0
        %v300 = vsel %vm263, %v254, 0.0
        %v301 = vadd.f32 %v299, %v300
        %302 = vadd.xlane.f32.xlu0 %v301
        %v303 = vpop.xlane.xlu0 %302
        %v304 = vsel %vm263, %v268, 0.0
        %v305 = vrot.slane %v304, 4
        %v306 = vadd.f32 %v304, %v305
        %v307 = vrot.slane %v306, 2
        %v308 = vadd.f32 %v306, %v307
        %v309 = vrot.slane %v308, 1
        %v310 = vadd.f32 %v308, %v309
        %v311 = vsel %vm263, %v273, 0.0
        %v312 = vrot.slane %v311, 4
        %v313 = vadd.f32 %v311, %v312
        %v314 = vrot.slane %v313, 2
        %v315 = vadd.f32 %v313, %v314
        %v316 = vrot.slane %v315, 1
        %v317 = vadd.f32 %v315, %v316
        %v318 = vsel %vm263, %v278, 0.0
        %v319 = vrot.slane %v318, 4
        %v320 = vadd.f32 %v318, %v319
        %v321 = vrot.slane %v320, 2
        %v322 = vadd.f32 %v320, %v321
        %v323 = vrot.slane %v322, 1
        %v324 = vadd.f32 %v322, %v323
        %v325 = vsel %vm263, %v283, 0.0
        %v326 = vrot.slane %v325, 4
        %v327 = vadd.f32 %v325, %v326
        %v328 = vrot.slane %v327, 2
        %v329 = vadd.f32 %v327, %v328
        %v330 = vrot.slane %v329, 1
        %v331 = vadd.f32 %v329, %v330
        %v332 = vsel %vm263, %v288, 0.0
        %v333 = vrot.slane %v332, 4
        %v334 = vadd.f32 %v332, %v333
        %v335 = vrot.slane %v334, 2
        %v336 = vadd.f32 %v334, %v335
        %v337 = vrot.slane %v336, 1
        %v338 = vadd.f32 %v336, %v337
        %v339 = vsel %vm263, %v293, 0.0
        %v340 = vrot.slane %v339, 4
        %v341 = vadd.f32 %v339, %v340
        %v342 = vrot.slane %v341, 2
        %v343 = vadd.f32 %v341, %v342
        %v344 = vrot.slane %v343, 1
        %v345 = vadd.f32 %v343, %v344
        %v346 = vsel %vm263, %v298, 0.0
        %v347 = vrot.slane %v346, 4
        %v348 = vadd.f32 %v346, %v347
        %v349 = vrot.slane %v348, 2
        %v350 = vadd.f32 %v348, %v349
        %v351 = vrot.slane %v350, 1
        %v352 = vadd.f32 %v350, %v351
        %v353 = vsel %vm263, %v303, 0.0
        %v354 = vrot.slane %v353, 4
        %v355 = vadd.f32 %v353, %v354
        %v356 = vrot.slane %v355, 2
        %v357 = vadd.f32 %v355, %v356
        %v358 = vrot.slane %v357, 1
        %v359 = vadd.f32 %v357, %v358
        %v360 = vmul.f32 %v231, %v231
        %v361 = vmul.f32 %v232, %v232
        %v362 = vmul.f32 %v233, %v233
        %v363 = vmul.f32 %v234, %v234
        %v364 = vmul.f32 %v235, %v235
        %v365 = vmul.f32 %v236, %v236
        %v366 = vmul.f32 %v237, %v237
        %v367 = vmul.f32 %v238, %v238
        %v376 = vcombine.high %v360, %v360
        %v377 = vcombine.high %v361, %v361
        %v378 = vcombine.high %v362, %v362
        %v379 = vcombine.high %v363, %v363
        %v380 = vcombine.high %v364, %v364
        %v381 = vcombine.high %v365, %v365
        %v382 = vcombine.high %v366, %v366
        %v383 = vcombine.high %v367, %v367
        %v392 = vsel %vm263, %v360, 0.0
        %v393 = vsel %vm263, %v376, 0.0
        %v394 = vadd.f32 %v392, %v393
        %395 = vadd.xlane.f32.xlu0 %v394
        %v396 = vpop.xlane.xlu0 %395
        %v397 = vsel %vm263, %v361, 0.0
        %v398 = vsel %vm263, %v377, 0.0
        %v399 = vadd.f32 %v397, %v398
        %400 = vadd.xlane.f32.xlu0 %v399
        %v401 = vpop.xlane.xlu0 %400
        %v402 = vsel %vm263, %v362, 0.0
        %v403 = vsel %vm263, %v378, 0.0
        %v404 = vadd.f32 %v402, %v403
        %405 = vadd.xlane.f32.xlu0 %v404
        %v406 = vpop.xlane.xlu0 %405
        %v407 = vsel %vm263, %v363, 0.0
        %v408 = vsel %vm263, %v379, 0.0
        %v409 = vadd.f32 %v407, %v408
        %410 = vadd.xlane.f32.xlu0 %v409
        %v411 = vpop.xlane.xlu0 %410
        %v412 = vsel %vm263, %v364, 0.0
        %v413 = vsel %vm263, %v380, 0.0
        %v414 = vadd.f32 %v412, %v413
        %415 = vadd.xlane.f32.xlu0 %v414
        %v416 = vpop.xlane.xlu0 %415
        %v417 = vsel %vm263, %v365, 0.0
        %v418 = vsel %vm263, %v381, 0.0
        %v419 = vadd.f32 %v417, %v418
        %420 = vadd.xlane.f32.xlu0 %v419
        %v421 = vpop.xlane.xlu0 %420
        %v422 = vsel %vm263, %v366, 0.0
        %v423 = vsel %vm263, %v382, 0.0
        %v424 = vadd.f32 %v422, %v423
        %425 = vadd.xlane.f32.xlu0 %v424
        %v426 = vpop.xlane.xlu0 %425
        %v427 = vsel %vm263, %v367, 0.0
        %v428 = vsel %vm263, %v383, 0.0
        %v429 = vadd.f32 %v427, %v428
        %430 = vadd.xlane.f32.xlu0 %v429
        %v431 = vpop.xlane.xlu0 %430
        %v432 = vsel %vm263, %v396, 0.0
        %v433 = vrot.slane %v432, 4
        %v434 = vadd.f32 %v432, %v433
        %v435 = vrot.slane %v434, 2
        %v436 = vadd.f32 %v434, %v435
        %v437 = vrot.slane %v436, 1
        %v438 = vadd.f32 %v436, %v437
        %v439 = vsel %vm263, %v401, 0.0
        %v440 = vrot.slane %v439, 4
        %v441 = vadd.f32 %v439, %v440
        %v442 = vrot.slane %v441, 2
        %v443 = vadd.f32 %v441, %v442
        %v444 = vrot.slane %v443, 1
        %v445 = vadd.f32 %v443, %v444
        %v446 = vsel %vm263, %v406, 0.0
        %v447 = vrot.slane %v446, 4
        %v448 = vadd.f32 %v446, %v447
        %v449 = vrot.slane %v448, 2
        %v450 = vadd.f32 %v448, %v449
        %v451 = vrot.slane %v450, 1
        %v452 = vadd.f32 %v450, %v451
        %v453 = vsel %vm263, %v411, 0.0
        %v454 = vrot.slane %v453, 4
        %v455 = vadd.f32 %v453, %v454
        %v456 = vrot.slane %v455, 2
        %v457 = vadd.f32 %v455, %v456
        %v458 = vrot.slane %v457, 1
        %v459 = vadd.f32 %v457, %v458
        %v460 = vsel %vm263, %v416, 0.0
        %v461 = vrot.slane %v460, 4
        %v462 = vadd.f32 %v460, %v461
        %v463 = vrot.slane %v462, 2
        %v464 = vadd.f32 %v462, %v463
        %v465 = vrot.slane %v464, 1
        %v466 = vadd.f32 %v464, %v465
        %v467 = vsel %vm263, %v421, 0.0
        %v468 = vrot.slane %v467, 4
        %v469 = vadd.f32 %v467, %v468
        %v470 = vrot.slane %v469, 2
        %v471 = vadd.f32 %v469, %v470
        %v472 = vrot.slane %v471, 1
        %v473 = vadd.f32 %v471, %v472
        %v474 = vsel %vm263, %v426, 0.0
        %v475 = vrot.slane %v474, 4
        %v476 = vadd.f32 %v474, %v475
        %v477 = vrot.slane %v476, 2
        %v478 = vadd.f32 %v476, %v477
        %v479 = vrot.slane %v478, 1
        %v480 = vadd.f32 %v478, %v479
        %v481 = vsel %vm263, %v431, 0.0
        %v482 = vrot.slane %v481, 4
        %v483 = vadd.f32 %v481, %v482
        %v484 = vrot.slane %v483, 2
        %v485 = vadd.f32 %v483, %v484
        %v486 = vrot.slane %v485, 1
        %v487 = vadd.f32 %v485, %v486
        %v488 = vrcp.pop 1024.0
        %v489 = vmul.f32 %v310, %v488
        %v490 = vmul.f32 %v317, %v488
        %v491 = vmul.f32 %v324, %v488
        %v492 = vmul.f32 %v331, %v488
        %v493 = vmul.f32 %v338, %v488
        %v494 = vmul.f32 %v345, %v488
        %v495 = vmul.f32 %v352, %v488
        %v496 = vmul.f32 %v359, %v488
        %v497 = vmul.f32 %v438, %v488
        %v498 = vmul.f32 %v445, %v488
        %v499 = vmul.f32 %v452, %v488
        %v500 = vmul.f32 %v459, %v488
        %v501 = vmul.f32 %v466, %v488
        %v502 = vmul.f32 %v473, %v488
        %v503 = vmul.f32 %v480, %v488
        %v504 = vmul.f32 %v487, %v488
        %v505 = vmul.f32 %v489, %v489
        %v506 = vmul.f32 %v490, %v490
        %v507 = vmul.f32 %v491, %v491
        %v508 = vmul.f32 %v492, %v492
        %v509 = vmul.f32 %v493, %v493
        %v510 = vmul.f32 %v494, %v494
        %v511 = vmul.f32 %v495, %v495
        %v512 = vmul.f32 %v496, %v496
        %v513 = vsub.f32 %v497, %v505
        %v514 = vsub.f32 %v498, %v506
        %v515 = vsub.f32 %v499, %v507
        %v516 = vsub.f32 %v500, %v508
        %v517 = vsub.f32 %v501, %v509
        %v518 = vsub.f32 %v502, %v510
        %v519 = vsub.f32 %v503, %v511
        %v520 = vsub.f32 %v504, %v512
        %v521 = vadd.f32 %v513, 1e-05
        %v522 = vadd.f32 %v514, 1e-05
        %v523 = vadd.f32 %v515, 1e-05
        %v524 = vadd.f32 %v516, 1e-05
        %v525 = vadd.f32 %v517, 1e-05
        %v526 = vadd.f32 %v518, 1e-05
        %v527 = vadd.f32 %v519, 1e-05
        %v528 = vadd.f32 %v520, 1e-05
        %v529 = vrsqrt.pop %v521
        %v530 = vrsqrt.pop %v522
        %v531 = vrsqrt.pop %v523
        %v532 = vrsqrt.pop %v524
        %v533 = vrsqrt.pop %v525
        %v534 = vrsqrt.pop %v526
        %v535 = vrsqrt.pop %v527
        %v536 = vrsqrt.pop %v528
        %v537 = vld [vmem:[%s1] sm:$0xf]
        %v538 = vld [vmem:[%s1 + $0x4] sm:$0xf]
        %v539 = vld [vmem:[%s1 + $0x8] sm:$0xf]
        %v540 = vld [vmem:[%s1 + $0xc] sm:$0xf]
        %v541 = vld [vmem:[%s1 + $0x10] sm:$0xf]
        %v542 = vld [vmem:[%s1 + $0x14] sm:$0xf]
        %v543 = vld [vmem:[%s1 + $0x18] sm:$0xf]
        %v544 = vld [vmem:[%s1 + $0x1c] sm:$0xf]
        %v545 = vmul.f32 %v537, %v529
        %v546 = vmul.f32 %v538, %v530
        %v547 = vmul.f32 %v539, %v531
        %v548 = vmul.f32 %v540, %v532
        %v549 = vmul.f32 %v541, %v533
        %v550 = vmul.f32 %v542, %v534
        %v551 = vmul.f32 %v543, %v535
        %v552 = vmul.f32 %v544, %v536
        %v553 = vld [vmem:[%s2] sm:$0xf]
        %v554 = vld [vmem:[%s2 + $0x4] sm:$0xf]
        %v555 = vld [vmem:[%s2 + $0x8] sm:$0xf]
        %v556 = vld [vmem:[%s2 + $0xc] sm:$0xf]
        %v557 = vld [vmem:[%s2 + $0x10] sm:$0xf]
        %v558 = vld [vmem:[%s2 + $0x14] sm:$0xf]
        %v559 = vld [vmem:[%s2 + $0x18] sm:$0xf]
        %v560 = vld [vmem:[%s2 + $0x1c] sm:$0xf]
        %v561 = vmul.f32 %v489, %v545
        %v562 = vmul.f32 %v490, %v546
        %v563 = vmul.f32 %v491, %v547
        %v564 = vmul.f32 %v492, %v548
        %v565 = vmul.f32 %v493, %v549
        %v566 = vmul.f32 %v494, %v550
        %v567 = vmul.f32 %v495, %v551
        %v568 = vmul.f32 %v496, %v552
        %v569 = vsub.f32 %v553, %v561
        %v570 = vsub.f32 %v554, %v562
        %v571 = vsub.f32 %v555, %v563
        %v572 = vsub.f32 %v556, %v564
        %v573 = vsub.f32 %v557, %v565
        %v574 = vsub.f32 %v558, %v566
        %v575 = vsub.f32 %v559, %v567
        %v576 = vsub.f32 %v560, %v568
        %vm577 = vcmask 3072
        %578 = vst.msk [vmem:[%s225] sm:$0xf] %vm577, %v545
        %579 = vst.msk [vmem:[%s225 + $0x4] sm:$0xf] %vm577, %v546
        %580 = vst.msk [vmem:[%s225 + $0x8] sm:$0xf] %vm577, %v547
        %581 = vst.msk [vmem:[%s225 + $0xc] sm:$0xf] %vm577, %v548
        %582 = vst.msk [vmem:[%s225 + $0x10] sm:$0xf] %vm577, %v549
        %583 = vst.msk [vmem:[%s225 + $0x14] sm:$0xf] %vm577, %v550
        %584 = vst.msk [vmem:[%s225 + $0x18] sm:$0xf] %vm577, %v551
        %585 = vst.msk [vmem:[%s225 + $0x1c] sm:$0xf] %vm577, %v552
        %586 = vst.msk [vmem:[%s230] sm:$0xf] %vm577, %v569
        %587 = vst.msk [vmem:[%s230 + $0x4] sm:$0xf] %vm577, %v570
        %588 = vst.msk [vmem:[%s230 + $0x8] sm:$0xf] %vm577, %v571
        %589 = vst.msk [vmem:[%s230 + $0xc] sm:$0xf] %vm577, %v572
        %590 = vst.msk [vmem:[%s230 + $0x10] sm:$0xf] %vm577, %v573
        %591 = vst.msk [vmem:[%s230 + $0x14] sm:$0xf] %vm577, %v574
        %592 = vst.msk [vmem:[%s230 + $0x18] sm:$0xf] %vm577, %v575
        %593 = vst.msk [vmem:[%s230 + $0x1c] sm:$0xf] %vm577, %v576
        %p594 = scmp.lt.s32.totalorder %s19, 1
        %s595 = scalar_select %p594, %s19, 1
        %s596 = smul.addr %s595, 8
        %s597 = smul.addr %s596, 4
        %s598 = scalar_lea.vmem %s3, %s597
        %p599 = scmp.lt.s32.totalorder %s19, 1
        %s600 = scalar_select %p599, %s19, 1
        %s601 = smul.addr %s600, 8
        %s602 = smul.addr %s601, 4
        %s603 = scalar_lea.vmem %s4, %s602
        // Predicated region
        $region37: #{tpu_custom_call.1} parent=31 // pred_check
          %p604 = pneg %p105
        $region38: #{tpu_custom_call.1} parent=31 // pred_check_branch
          %606 = sbr.rel (%p604) target = $region40
        $region39: #{tpu_custom_call.1} parent=31 // pred_region
          _
        $region40: #{tpu_custom_call.1} parent=31 // pred_fallthru
          _
        // Predicated region
        $region41: #{tpu_custom_call.1} parent=31 // pred_check
          %p607 = pneg %p131
        $region42: #{tpu_custom_call.1} parent=31 // pred_check_branch
          %609 = sbr.rel (%p607) target = $region44
        $region43: #{tpu_custom_call.1} parent=31 // pred_region
          _
        $region44: #{tpu_custom_call.1} parent=31 // pred_fallthru
          _
      $region32: #{tpu_custom_call.1} parent=5 // pred_fallthru
        _
      %p610 = scmp.le.s32.totalorder 2, %s14
      // Predicated region
      $region45: #{tpu_custom_call.1} parent=5 // pred_check
        %p611 = pneg %p610
      $region46: #{tpu_custom_call.1} parent=5 // pred_check_branch
        %613 = sbr.rel (%p611) target = $region48
      $region47: #{tpu_custom_call.1} parent=5 // pred_region
        %s614 = ssub.s32 %s14, 2
        // Predicated region
        $region49: #{tpu_custom_call.1} parent=47 // pred_check
          %p615 = pneg %p111
        $region50: #{tpu_custom_call.1} parent=47 // pred_check_branch
          %617 = sbr.rel (%p615) target = $region52
        $region51: #{tpu_custom_call.1} parent=47 // pred_region
          %p618 = scmp.lt.s32.totalorder %s20, 1
          %s619 = scalar_select %p618, %s20, 1
          %s620 = smul.addr %s619, 8
          %s621 = smul.addr %s620, 4
          %s622 = scalar_lea.vmem %s3, %s621
        $region52: #{tpu_custom_call.1} parent=47 // pred_fallthru
          _
        // Predicated region
        $region53: #{tpu_custom_call.1} parent=47 // pred_check
          %p623 = pneg %p137
        $region54: #{tpu_custom_call.1} parent=47 // pred_check_branch
          %625 = sbr.rel (%p623) target = $region56
        $region55: #{tpu_custom_call.1} parent=47 // pred_region
          %p626 = scmp.lt.s32.totalorder %s20, 1
          %s627 = scalar_select %p626, %s20, 1
          %s628 = smul.addr %s627, 8
          %s629 = smul.addr %s628, 4
          %s630 = scalar_lea.vmem %s4, %s629
        $region56: #{tpu_custom_call.1} parent=47 // pred_fallthru
          _
      $region48: #{tpu_custom_call.1} parent=5 // pred_fallthru
        _
    $region6: #{tpu_custom_call.1} parent=1 // loop_footer
      %s18 = sadd.s32 1, %s14
    $region7: #{tpu_custom_call.1} parent=1 // loop_footer_branch
      %13 = sbr.rel target = $region3
    $region8: #{tpu_custom_call.1} parent=1 // loop_exit
      _
    %631 = vsyncpa [#allocation3], 1
    %s632 = scalar_lea.sflag [#allocation3], 1
    %633 = vsyncpa %s632, 1

</llo_original>
